<compile_context>
chip_gen: v7x
topology: tpu7x:2x2x1
jax: 0.10.0
libtpu: 0.0.40
codegen_flags: <defaults>
</compile_context>

<pallas_src>
import math
from functools import partial

import jax
import jax.numpy as jnp
from jax.experimental import pallas as pl
from jax.experimental.pallas import tpu as pltpu

EPS = 1e-6       # matches partial(nn.LayerNorm, eps=1e-06)
NEG_INF = -1e30  # key-column mask value (avoids inf-inf NaNs)


def _layernorm(x, w, b):
    mu = jnp.mean(x, axis=-1, keepdims=True)
    var = jnp.mean((x - mu) ** 2, axis=-1, keepdims=True)
    return (x - mu) * jax.lax.rsqrt(var + EPS) * w + b


# ------------------------------ kernels ------------------------------

def patch_embed_kernel(patches_ref, w_ref, b_ref, o_ref):
    # (tile, 3*p*p) @ (3*p*p, D) + (1, D)  -> conv_proj as matmul (bf16 -> f32)
    o_ref[...] = (jnp.dot(patches_ref[...], w_ref[...],
                          preferred_element_type=jnp.float32) + b_ref[...])


def encoder_stack_kernel(x_ref,
                         ln1w, ln1b, wqkv, bqkv, wo, bo,
                         ln2w, ln2b, w1, b1, w2, b2,
                         encln_w, encln_b, head_w, head_b,
                         o_ref, carry, *, num_heads, valid_len):
    layer = pl.program_id(1)
    Bt, Sp, D = x_ref.shape
    H = num_heads
    hd = D // H

    @pl.when(layer == 0)
    def _():
        carry[...] = x_ref[...].reshape(Bt * Sp, D)   # load residual stream once per block

    x = carry[...]                                    # (Bt*Sp, D) f32

    # ---- LayerNorm 1 + fused QKV projection (single full-width matmul) ----
    xn = _layernorm(x, ln1w[0], ln1b[0]).astype(jnp.bfloat16)
    qkv = jnp.dot(xn, wqkv[0], preferred_element_type=jnp.float32) + bqkv[0]   # (Bt*Sp, 3D)
    # Head-major column packing -> (Bt*H, Sp, 3hd).  Pure layout move (no VALU/MXU).
    qkv = qkv.astype(jnp.bfloat16).reshape(Bt, Sp, H, 3 * hd)
    qkv = qkv.transpose(0, 2, 1, 3).reshape(Bt * H, Sp, 3 * hd)
    q = qkv[:, :, 0:hd]                # 1/sqrt(hd) is folded into wq/bq at init
    k = qkv[:, :, hd:2 * hd]
    v = qkv[:, :, 2 * hd:3 * hd]

    s = jnp.einsum('bqd,bkd->bqk', q, k,
                   preferred_element_type=jnp.float32)          # (Bt*H, Sp, Sp)
    key_ok = jax.lax.broadcasted_iota(jnp.int32, (1, 1, Sp), 2) < valid_len
    s = jnp.where(key_ok, s, NEG_INF)                 # mask padded key columns
    m = jnp.max(s, axis=-1, keepdims=True)
    e = jnp.exp(s - m)
    p = e * pl.reciprocal(jnp.sum(e, axis=-1, keepdims=True), approx=True)

    ctx = jnp.einsum('bqk,bkd->bqd', p.astype(jnp.bfloat16), v,
                     preferred_element_type=jnp.float32)        # (Bt*H, Sp, hd)
    # Re-concatenate heads (layout move only), then a single K=D out-projection.
    ctx = (ctx.astype(jnp.bfloat16)
              .reshape(Bt, H, Sp, hd).transpose(0, 2, 1, 3)
              .reshape(Bt * Sp, D))
    attn = jnp.dot(ctx, wo[0], preferred_element_type=jnp.float32) + bo[0]
    x1 = x + attn                                     # residual (dropout p=0)

    # ---- LayerNorm 2 + MLP (Linear -> exact GELU -> Linear) ----
    # TODO(synk): tile mlp_dim with an inner reduction (extra grid axis /
    # emit_pipeline, tM~512-1024) for ViT-B-scale weights on v7x to bound
    # resident w1/w2 + h1 VMEM; unnecessary at these shapes.
    yn = _layernorm(x1, ln2w[0], ln2b[0]).astype(jnp.bfloat16)
    h1 = jnp.dot(yn, w1[0], preferred_element_type=jnp.float32) + b1[0]
    h1 = jax.nn.gelu(h1, approximate=False).astype(jnp.bfloat16)    # erf GELU
    y = jnp.dot(h1, w2[0], preferred_element_type=jnp.float32) + b2[0]
    out = x1 + y

    carry[...] = out

    @pl.when(layer == pl.num_programs(1) - 1)
    def _():
        # Fused epilogue: final encoder LayerNorm on the class token + head.
        cls = out.reshape(Bt, Sp, D)[:, 0, :]                       # (Bt, D)
        cls = _layernorm(cls, encln_w[...], encln_b[...])
        logits = jnp.dot(cls.astype(jnp.bfloat16), head_w[...],
                         preferred_element_type=jnp.float32) + head_b[...]
        o_ref[...] = logits.reshape(Bt, 1, logits.shape[-1])


# ------------------------------ wrappers ------------------------------

def _const_spec(shape):
    n = len(shape)
    return pl.BlockSpec(shape, lambda b, l, _n=n: (0,) * _n)


def _stacked_spec(w):
    blk = (1,) + w.shape[1:]
    n = len(blk) - 1
    return pl.BlockSpec(blk, lambda b, l, _n=n: (l,) + (0,) * _n)


def _vmem_limit_bytes():
    # ~75% of physical VMEM: ~96 MiB on v5e/v6e (128 MiB), ~48 MiB on v7x (64 MiB).
    try:
        cap = pltpu.get_tpu_info().vmem_capacity_bytes
        return int(cap * 3 // 4)
    except Exception:
        return 48 * 1024 * 1024        # safe on every generation


def _auto_batch_block(B, max_bt=4):
    # Largest divisor of B up to max_bt: amortizes layer-weight DMA over Bt
    # sequences.  (On v7x, prefer B//Bt even so both TensorCores stay busy.)
    bt = 1
    for c in range(2, max_bt + 1):
        if B % c == 0:
            bt = c
    return bt


def patch_embed(patches, w_t, b):
    NP, K = patches.shape
    D = w_t.shape[1]
    tile = min(NP, 512)                            # row tiling -> pipelined DMA
    return pl.pallas_call(
        patch_embed_kernel,
        out_shape=jax.ShapeDtypeStruct((NP, D), jnp.float32),
        grid=(pl.cdiv(NP, tile),),
        in_specs=[pl.BlockSpec((tile, K), lambda i: (i, 0)),
                  pl.BlockSpec((K, D), lambda i: (0, 0)),
                  pl.BlockSpec((1, D), lambda i: (0, 0))],
        out_specs=pl.BlockSpec((tile, D), lambda i: (i, 0)),
        compiler_params=pltpu.CompilerParams(
            dimension_semantics=("parallel",)),
    )(patches, w_t, b)


def encoder_stack(seq, sp, enc_ln_w, enc_ln_b, head_w, head_b,
                  *, num_heads, valid_len, batch_block=None):
    B, Sp, D = seq.shape
    L = sp["wqkv"].shape[0]
    NC = head_w.shape[1]
    Bt = batch_block or _auto_batch_block(B)
    assert B % Bt == 0

    names = ["ln1_w", "ln1_b", "wqkv", "bqkv", "wo", "bo",
             "ln2_w", "ln2_b", "w1", "b1", "w2", "b2"]
    weights = [sp[n] for n in names]
    head_params = (enc_ln_w, enc_ln_b, head_w, head_b)

    in_specs = [pl.BlockSpec((Bt, Sp, D), lambda b, l: (b, 0, 0))]
    in_specs += [_stacked_spec(w) for w in weights]
    in_specs += [_const_spec(a.shape) for a in head_params]   # resident (constant index)

    out = pl.pallas_call(
        partial(encoder_stack_kernel, num_heads=num_heads, valid_len=valid_len),
        out_shape=jax.ShapeDtypeStruct((B, 1, NC), jnp.float32),
        grid=(B // Bt, L),                         # batch blocks parallel, layers inner
        in_specs=in_specs,
        out_specs=pl.BlockSpec((Bt, 1, NC), lambda b, l: (b, 0, 0)),
        scratch_shapes=[pltpu.VMEM((Bt * Sp, D), jnp.float32)],   # activation carry
        compiler_params=pltpu.CompilerParams(
            dimension_semantics=("parallel", "arbitrary"),
            vmem_limit_bytes=_vmem_limit_bytes()),
    )(seq, *weights, *head_params)
    return out[:, 0, :]


def vit_forward(x, params, *, patch_size, num_heads):
    N, C, H, W = x.shape
    p = patch_size
    n_h, n_w = H // p, W // p
    # Patch extraction glue: (N,C,H,W) -> (N*P, C*p*p) in (c, ph, pw) order,
    # matching conv_proj.weight.reshape(D, -1).
    patches = x.reshape(N, C, n_h, p, n_w, p).transpose(0, 2, 4, 1, 3, 5)
    patches = patches.reshape(N * n_h * n_w, C * p * p).astype(jnp.bfloat16)
    tok = patch_embed(patches, params["conv_w_t"], params["conv_b"])
    D = tok.shape[-1]
    tok = tok.reshape(N, n_h * n_w, D)

    cls = jnp.broadcast_to(params["class_token"], (N, 1, D))
    seq = jnp.concatenate([cls, tok], axis=1) + params["pos_embedding"]
    S = seq.shape[1]
    Sp = ((S + 15) // 16) * 16                     # sublane pad only (no 128 pad)
    seq = jnp.pad(seq, ((0, 0), (0, Sp - S), (0, 0)))

    return encoder_stack(seq, params["stacked"],
                         params["enc_ln_w"], params["enc_ln_b"],
                         params["head_w_t"], params["head_b"],
                         num_heads=num_heads, valid_len=S)


# ------------------------------ parameters ------------------------------

def init_params(key, *, image_size, patch_size, num_layers, num_heads,
                hidden_dim, mlp_dim, num_classes):
    D, M, p = hidden_dim, mlp_dim, patch_size
    hd = D // num_heads
    scale = 1.0 / math.sqrt(hd)
    S = (image_size // patch_size) ** 2 + 1
    fan_in = 3 * p * p
    keys = jax.random.split(key, 2 + num_layers)
    conv_w = jax.random.normal(keys[0], (D, 3, p, p), jnp.float32) * math.sqrt(1.0 / fan_in)
    params = {
        "conv_w_t": conv_w.reshape(D, 3 * p * p).T.astype(jnp.bfloat16),
        "conv_b": jnp.zeros((1, D), jnp.float32),
        "class_token": jnp.zeros((1, 1, D), jnp.float32),
        "pos_embedding": jax.random.normal(keys[1], (1, S, D), jnp.float32) * 0.02,
        "enc_ln_w": jnp.ones((1, D), jnp.float32),
        "enc_ln_b": jnp.zeros((1, D), jnp.float32),
        # heads.head is zero-initialized in the PyTorch __init__
        "head_w_t": jnp.zeros((D, num_classes), jnp.bfloat16),
        "head_b": jnp.zeros((1, num_classes), jnp.float32),
    }
    layers = []
    for i in range(num_layers):
        lk = jax.random.split(keys[2 + i], 4)
        in_proj_w = jax.random.normal(lk[0], (3 * D, D), jnp.float32) * math.sqrt(1.0 / D)
        in_proj_b = jnp.zeros((3 * D,), jnp.float32)
        out_proj_w = jax.random.normal(lk[1], (D, D), jnp.float32) * math.sqrt(1.0 / D)
        w1 = jax.random.normal(lk[2], (M, D), jnp.float32) * math.sqrt(1.0 / D)
        w2 = jax.random.normal(lk[3], (D, M), jnp.float32) * math.sqrt(1.0 / M)
        # Fused QKV: flat (D, 3D) with head-major columns [q_h | k_h | v_h] per
        # head; 1/sqrt(hd) folded into the q weights and bias.
        wq = in_proj_w[0:D] * scale
        wk = in_proj_w[D:2 * D]
        wv = in_proj_w[2 * D:3 * D]
        bq = in_proj_b[0:D] * scale
        bk = in_proj_b[D:2 * D]
        bv = in_proj_b[2 * D:3 * D]
        w3 = jnp.stack([wq, wk, wv], axis=0).reshape(3, num_heads, hd, D)
        wqkv_flat = w3.transpose(3, 1, 0, 2).reshape(D, 3 * D)        # (D, 3D)
        b3 = jnp.stack([bq, bk, bv], axis=0).reshape(3, num_heads, hd)
        bqkv_flat = b3.transpose(1, 0, 2).reshape(1, 3 * D)
        layers.append({
            "ln1_w": jnp.ones((1, D), jnp.float32),
            "ln1_b": jnp.zeros((1, D), jnp.float32),
            "wqkv": wqkv_flat.astype(jnp.bfloat16),
            "bqkv": bqkv_flat,
            "wo": out_proj_w.T.astype(jnp.bfloat16),   # (D, D); applied to (h, hd)-concat
            "bo": jnp.zeros((1, D), jnp.float32),
            "ln2_w": jnp.ones((1, D), jnp.float32),
            "ln2_b": jnp.zeros((1, D), jnp.float32),
            "w1": w1.T.astype(jnp.bfloat16),           # (D, M)
            "b1": jnp.zeros((1, M), jnp.float32),
            "w2": w2.T.astype(jnp.bfloat16),           # (M, D)
            "b2": jnp.zeros((1, D), jnp.float32),
        })
    # Stack per-layer weights with a leading num_layers axis for the layer grid.
    params["stacked"] = {k: jnp.stack([ly[k] for ly in layers]) for k in layers[0]}
    return params


if __name__ == "__main__":
    # Small ViT: image 16, patch 8 -> 4 patches + cls = seq 5 (padded to 16).
    B, IMG, P = 2, 16, 8
    D, MLP, HEADS, LAYERS, NCLS = 32, 64, 4, 2, 16

    key = jax.random.PRNGKey(0)
    kx, kp = jax.random.split(key)
    x = jax.random.normal(kx, (B, 3, IMG, IMG), jnp.float32)
    params = init_params(kp, image_size=IMG, patch_size=P, num_layers=LAYERS,
                         num_heads=HEADS, hidden_dim=D, mlp_dim=MLP,
                         num_classes=NCLS)

    out = vit_forward(x, params, patch_size=P, num_heads=HEADS)
    out = jax.block_until_ready(out)
    assert out.shape == (B, NCLS)
    assert bool(jnp.all(jnp.isfinite(out)))
    print("KERNEL_OK")
</pallas_src>

<mosaic_0001>
module attributes {stable_mosaic.version = 11 : i64} {
  func.func @patch_embed_kernel(%arg0: i32, %arg1: memref<8x192xbf16, #tpu.memory_space<vmem>>, %arg2: memref<192x32xbf16, #tpu.memory_space<vmem>>, %arg3: memref<1x32xf32, #tpu.memory_space<vmem>>, %arg4: memref<8x32xf32, #tpu.memory_space<vmem>>) attributes {dimension_semantics = [#tpu.dimension_semantics<parallel>], iteration_bounds = array<i64: 1>, scalar_prefetch = 0 : i64, scratch_operands = 0 : i64, tpu.core_type = #tpu.core_type<tc>, window_params = [{transform_indices = @transform_0, window_bounds = array<i64: 8, 192>}, {pipeline_mode = #tpu.pipeline_mode<synchronous>, transform_indices = @transform_1, window_bounds = array<i64: 192, 32>}, {pipeline_mode = #tpu.pipeline_mode<synchronous>, transform_indices = @transform_2, window_bounds = array<i64: 1, 32>}, {transform_indices = @transform_3, window_bounds = array<i64: 8, 32>}]} {
    %c0 = arith.constant 0 : index
    %c0_0 = arith.constant 0 : index
    %0 = vector.load %arg1[%c0, %c0_0] : memref<8x192xbf16, #tpu.memory_space<vmem>>, vector<8x192xbf16>
    %c0_1 = arith.constant 0 : index
    %c0_2 = arith.constant 0 : index
    %1 = vector.load %arg2[%c0_1, %c0_2] : memref<192x32xbf16, #tpu.memory_space<vmem>>, vector<192x32xbf16>
    %cst = arith.constant dense<0.000000e+00> : vector<8x32xf32>
    %2 = tpu.matmul %0, %1, %cst {dimension_numbers = #tpu.dot_dimension_numbers<[1], [0], [0], [1], [0, 0, 1, 1], [], []>} : vector<8x192xbf16>, vector<192x32xbf16>, vector<8x32xf32> -> vector<8x32xf32>
    %c0_3 = arith.constant 0 : index
    %c0_4 = arith.constant 0 : index
    %3 = vector.load %arg3[%c0_3, %c0_4] : memref<1x32xf32, #tpu.memory_space<vmem>>, vector<1x32xf32>
    %4 = vector.broadcast %3 : vector<1x32xf32> to vector<8x32xf32>
    %5 = arith.addf %2, %4 : vector<8x32xf32>
    %c0_5 = arith.constant 0 : index
    %c0_6 = arith.constant 0 : index
    %6 = vector.load %arg4[%c0_5, %c0_6] : memref<8x32xf32, #tpu.memory_space<vmem>>, vector<8x32xf32>
    tpu.vector_store %arg4[%c0_5, %c0_6], %5 {strides = array<i32>} : memref<8x32xf32, #tpu.memory_space<vmem>>, vector<8x32xf32>,
    return
  }
  func.func @transform_0(%arg0: i32) -> (i32, i32) {
    %c0_i32 = arith.constant 0 : i32
    %c0_i32_0 = arith.constant 0 : i32
    return %arg0, %c0_i32 : i32, i32
  }
  func.func @transform_1(%arg0: i32) -> (i32, i32) {
    %c0_i32 = arith.constant 0 : i32
    %c0_i32_0 = arith.constant 0 : i32
    %c0_i32_1 = arith.constant 0 : i32
    return %c0_i32, %c0_i32_0 : i32, i32
  }
  func.func @transform_2(%arg0: i32) -> (i32, i32) {
    %c0_i32 = arith.constant 0 : i32
    %c0_i32_0 = arith.constant 0 : i32
    %c0_i32_1 = arith.constant 0 : i32
    return %c0_i32, %c0_i32_0 : i32, i32
  }
  func.func @transform_3(%arg0: i32) -> (i32, i32) {
    %c0_i32 = arith.constant 0 : i32
    %c0_i32_0 = arith.constant 0 : i32
    return %arg0, %c0_i32 : i32, i32
  }
}

</mosaic_0001>

<llo_original>
// kernel: tpu_custom_call.1
$region0: #{tpu_custom_call.1}
  #allocation0 [shape = 'u32[]', space=smem, size = 0x4, offset = 0x4, fixed_abs, tag = 'smem constant byte address 0x4 - core index']
  #allocation1 [shape = 'u32[144,128]{1,0:T(1,128)}', space=vmem, size = 0x12000, scoped, tag = 'internal scratch']
  %s0 = inlined_call_operand.vmem [shape: bf16[8,192], index: 0, kind: input, shape index: {}]
  %s1 = inlined_call_operand.vmem [shape: bf16[192,32], index: 1, kind: input, shape index: {}]
  %s2 = inlined_call_operand.vmem [shape: f32[1,32], index: 2, kind: input, shape index: {}]
  %s3 = inlined_call_operand.hbm [shape: f32[8,32], index: 3, kind: output, shape index: {}]
  %s4 = sld [smem:[#allocation0]]
  $region22: #{tpu_custom_call.1} parent=0
    _
  %s6 = ssub.s32 1, %s4
  %s7 = scalar_select 0, %s6, %s4
  $region1: #{tpu_custom_call.1} parent=0
    #allocation2 [shape = 'u8[4096]{0}', space=vmem, size = 0x1000, scoped, tag = 'output window, operand 0, single buffered']
    #allocation3 [shape = 's32[1]{0}', space=sflag, size = 0x4, scoped, tag = 'scoped memory for tpu_custom_call.1']
    %8 = vsyncpa [#allocation3], 0
    // Predicated region
    $region2: #{tpu_custom_call.1} parent=1 // pred_check
      _
    $region3: #{tpu_custom_call.1} parent=1 // pred_check_branch
      %10 = sbr.rel (0) target = $region5
    $region4: #{tpu_custom_call.1} parent=1 // pred_region
      _
    $region5: #{tpu_custom_call.1} parent=1 // pred_fallthru
      _
    // Predicated region
    $region6: #{tpu_custom_call.1} parent=1 // pred_check
      _
    $region7: #{tpu_custom_call.1} parent=1 // pred_check_branch
      %12 = sbr.rel (0) target = $region9
    $region8: #{tpu_custom_call.1} parent=1 // pred_region
      _
    $region9: #{tpu_custom_call.1} parent=1 // pred_fallthru
      _
    // Predicated region
    $region10: #{tpu_custom_call.1} parent=1 // pred_check
      _
    $region11: #{tpu_custom_call.1} parent=1 // pred_check_branch
      %14 = sbr.rel (0) target = $region13
    $region12: #{tpu_custom_call.1} parent=1 // pred_region
      _
    $region13: #{tpu_custom_call.1} parent=1 // pred_fallthru
      _
    %v16 = vld [vmem:[%s0] sm:$0xff]
    %v17 = vld [vmem:[%s1] sm:$0xf]
    %v18 = vld [vmem:[%s1 + $0x4] sm:$0xf]
    %v19 = vld [vmem:[%s1 + $0x8] sm:$0xf]
    %v20 = vld [vmem:[%s1 + $0xc] sm:$0xf]
    %v21 = vld [vmem:[%s1 + $0x10] sm:$0xf]
    %v22 = vld [vmem:[%s1 + $0x14] sm:$0xf]
    %v23 = vld [vmem:[%s1 + $0x18] sm:$0xf]
    %v24 = vld [vmem:[%s1 + $0x1c] sm:$0xf]
    %v25 = vld [vmem:[%s1 + $0x20] sm:$0xf]
    %v26 = vld [vmem:[%s1 + $0x24] sm:$0xf]
    %v27 = vld [vmem:[%s1 + $0x28] sm:$0xf]
    %v28 = vld [vmem:[%s1 + $0x2c] sm:$0xf]
    %v29 = vld [vmem:[%s1 + $0x30] sm:$0xf]
    %v30 = vld [vmem:[%s1 + $0x34] sm:$0xf]
    %v31 = vld [vmem:[%s1 + $0x38] sm:$0xf]
    %v32 = vld [vmem:[%s1 + $0x3c] sm:$0xf]
    %v33 = vld [vmem:[%s1 + $0x40] sm:$0xf]
    %v34 = vld [vmem:[%s1 + $0x44] sm:$0xf]
    %v35 = vld [vmem:[%s1 + $0x48] sm:$0xf]
    %v36 = vld [vmem:[%s1 + $0x4c] sm:$0xf]
    %v37 = vld [vmem:[%s1 + $0x50] sm:$0xf]
    %v38 = vld [vmem:[%s1 + $0x54] sm:$0xf]
    %v39 = vld [vmem:[%s1 + $0x58] sm:$0xf]
    %v40 = vld [vmem:[%s1 + $0x5c] sm:$0xf]
    %v41 = vld [vmem:[%s2] sm:$0x1]
    %v43 = vlaneseq
    %v44 = vshrl.u32 %v43, 7
    %v45 = vsub.s32 0, %v44
    %v46 = vrot.slane %v41, %v45
    %v49 = vunpack.c.l.b16 %v16
    %v50 = vunpack.c.h.b16 %v16
    %v51 = vpack.c.b16 %v49, %v49
    %v52 = vpack.c.b16 %v50, %v50
    %v78 = vunpack.c.l.b16 %v17
    %v79 = vunpack.c.l.b16 %v18
    %v80 = vunpack.c.l.b16 %v19
    %v81 = vunpack.c.l.b16 %v20
    %v82 = vunpack.c.l.b16 %v21
    %v83 = vunpack.c.l.b16 %v22
    %v84 = vunpack.c.l.b16 %v23
    %v85 = vunpack.c.l.b16 %v24
    %v86 = vunpack.c.l.b16 %v25
    %v87 = vunpack.c.l.b16 %v26
    %v88 = vunpack.c.l.b16 %v27
    %v89 = vunpack.c.l.b16 %v28
    %v90 = vunpack.c.l.b16 %v29
    %v91 = vunpack.c.l.b16 %v30
    %v92 = vunpack.c.l.b16 %v31
    %v93 = vunpack.c.l.b16 %v32
    %v94 = vunpack.c.l.b16 %v33
    %v95 = vunpack.c.l.b16 %v34
    %v96 = vunpack.c.l.b16 %v35
    %v97 = vunpack.c.l.b16 %v36
    %v98 = vunpack.c.l.b16 %v37
    %v99 = vunpack.c.l.b16 %v38
    %v100 = vunpack.c.l.b16 %v39
    %v101 = vunpack.c.l.b16 %v40
    %v102 = vpack.c.b16 %v79, %v78
    %v103 = vpack.c.b16 %v81, %v80
    %v104 = vpack.c.b16 %v83, %v82
    %v105 = vpack.c.b16 %v85, %v84
    %v106 = vpack.c.b16 %v87, %v86
    %v107 = vpack.c.b16 %v89, %v88
    %v108 = vpack.c.b16 %v91, %v90
    %v109 = vpack.c.b16 %v93, %v92
    %v110 = vpack.c.b16 %v95, %v94
    %v111 = vpack.c.b16 %v97, %v96
    %v112 = vpack.c.b16 %v99, %v98
    %v113 = vpack.c.b16 %v101, %v100
    %vm126 = vcmask 523264
    %v128 = vsel %vm126, %v52, 0
    %130 = vmatprep.subr.bf16.mxu0 0
    %131 = vmatpush1.bf16.msra.mxu0 %v102
    %132 = vmatprep.subr.bf16.mxu0 0
    %133 = vmatpush1.bf16.msra.mxu0 %v103
    %134 = vmatprep.subr.bf16.mxu0 0
    %135 = vmatpush1.bf16.msra.mxu0 %v104
    %136 = vmatprep.subr.bf16.mxu0 0
    %137 = vmatpush1.bf16.msra.mxu0 %v105
    %138 = vmatprep.subr.bf16.mxu0 0
    %139 = vmatpush1.bf16.msra.mxu0 %v106
    %140 = vmatprep.subr.bf16.mxu0 0
    %141 = vmatpush1.bf16.msra.mxu0 %v107
    %142 = vmatprep.subr.bf16.mxu0 0
    %143 = vmatpush1.bf16.msra.mxu0 %v108
    %144 = vmatprep.subr.bf16.mxu0 0
    %145 = vmatpush1.bf16.msra.mxu0 %v109
    %146 = vmatprep.subr.bf16.mxu0 0
    %147 = vmatpush1.bf16.msra.mxu0 %v110
    %148 = vmatprep.subr.bf16.mxu0 0
    %149 = vmatpush1.bf16.msra.mxu0 %v111
    %150 = vmatprep.subr.bf16.mxu0 0
    %151 = vmatpush1.bf16.msra.mxu0 %v112
    %152 = vmatprep.subr.bf16.mxu0 0
    %153 = vmatpush1.bf16.msra.mxu0 %v113
    %154 = vmatprep.subr.bf16.mxu0 0
    %155 = vmatpush1.bf16.msra.mxu0 0
    %156 = vmatprep.subr.bf16.mxu0 0
    %157 = vmatpush1.bf16.msra.mxu0 0
    %158 = vmatprep.subr.bf16.mxu0 0
    %159 = vmatpush1.bf16.msra.mxu0 0
    %160 = vmatprep.subr.bf16.mxu0 0
    %161 = vmatpush1.bf16.msra.mxu0 0
    %162 = vmatprep.mubr.bf16.mxu0 %v128
    %163 = vmatmul.mubr.bf16.gmra.mrb[0].mxu0 %v51
    %v164 = vpop.f32.mrb[0].mxu0
    %v165 = vadd.f32 %v46, %v164
    %v166 = vpop.f32.mrb[0].mxu0
    %v167 = vpop.f32.mrb[0].mxu0
    %v168 = vpop.f32.mrb[0].mxu0
    %169 = vdwg.mxu0
    %vm170 = vcmask 261120
    %171 = vst.msk [vmem:[#allocation2] sm:$0xff] %vm170, %v165
    // Predicated region
    $region14: #{tpu_custom_call.1} parent=1 // pred_check
      _
    $region15: #{tpu_custom_call.1} parent=1 // pred_check_branch
      %173 = sbr.rel (0) target = $region17
    $region16: #{tpu_custom_call.1} parent=1 // pred_region
      %s175 = ssub.s32 128, 128
      %176 = vsyncadd [#allocation3], %s175
      %s178 = sshll.u32 [#allocation2], 4
      %s179 = int_to_ptr.vmem [resolvable:$true] %s178
      %181 = dma.vmem_to_hbm [thread:$0]  %s179, 128, %s3, [#allocation3]
    $region17: #{tpu_custom_call.1} parent=1 // pred_fallthru
      _
    // Predicated region
    $region18: #{tpu_custom_call.1} parent=1 // pred_check
      _
    $region19: #{tpu_custom_call.1} parent=1 // pred_check_branch
      %183 = sbr.rel (0) target = $region21
    $region20: #{tpu_custom_call.1} parent=1 // pred_region
      %184 = dma.done [#allocation3], 128
    $region21: #{tpu_custom_call.1} parent=1 // pred_fallthru
      _
    %185 = vsyncpa [#allocation3], 1

</llo_original>
